<compile_context>
chip_gen: v6e
topology: v6e:2x2x1
jax: 0.10.0
libtpu: 0.0.40
codegen_flags: <defaults>
</compile_context>

<pallas_src>
import jax
import jax.numpy as jnp
from jax.experimental import pallas as pl
from jax.experimental.pallas import tpu as pltpu


def _cdiv(a, b):
    return (a + b - 1) // b


def _round_up(x, m):
    return ((x + m - 1) // m) * m


def mlp_kernel(x_ref, obs_ref, t_ref,
               w1x_ref, w1o_ref, w1t_ref, b1_ref,
               w2_ref, b2_ref,
               w3_ref, b3_ref,
               w4_ref, b4_ref,
               o_ref):
    """Fused 4-layer MLP on one batch tile (f32 throughout, MXU matmuls).

    Layer 1 fuses the concat: the (B, 1) observation / time columns become
    rank-1 (VPU broadcast) contributions instead of padded matmul columns.
    """
    # Layer 1: x @ W1[:dx] + obs * W1[dx] + t * W1[dx+1] + b1
    h = jnp.dot(x_ref[...], w1x_ref[...], preferred_element_type=jnp.float32)
    h = h + obs_ref[...] * w1o_ref[...] + t_ref[...] * w1t_ref[...] + b1_ref[...]
    h = jnp.tanh(h)

    # Hidden layers 2, 3.
    h = jnp.tanh(jnp.dot(h, w2_ref[...], preferred_element_type=jnp.float32)
                 + b2_ref[...])
    h = jnp.tanh(jnp.dot(h, w3_ref[...], preferred_element_type=jnp.float32)
                 + b3_ref[...])

    # Output layer (linear).
    out = jnp.dot(h, w4_ref[...], preferred_element_type=jnp.float32) + b4_ref[...]

    o_ref[...] = out.astype(o_ref.dtype)   # narrow (tb, out_dim) store


def prepare_params(params, input_dim):
    """One-time prep: split W1 into the x_input block and the obs / t rows so
    the concat can be fused into the kernel.  Everything stays f32 (weights
    are VMEM-resident, so narrowing them would not reduce HBM traffic)."""
    (w1, b1), (w2, b2), (w3, b3), (w4, b4) = params
    assert w1.shape[0] == input_dim + 2, (
        "expected first Linear in_features == input_dim + 2 (obs(1) + t(1))")
    w1x = w1[:input_dim]                          # (input_dim, H1)
    w1o = w1[input_dim:input_dim + 1]             # (1, H1)
    w1t = w1[input_dim + 1:input_dim + 2]         # (1, H1)
    f32 = jnp.float32
    return (w1x.astype(f32), w1o.astype(f32), w1t.astype(f32), b1.astype(f32),
            w2.astype(f32), b2.astype(f32),
            w3.astype(f32), b3.astype(f32),
            w4.astype(f32), b4.astype(f32))


def mlp_forward(x_input, observations, t, prepped_params, tile_b=1024):
    """Batch-tiled Pallas call: narrow streamed activations, resident weights."""
    (w1x, w1o, w1t, b1, w2, b2, w3, b3, w4, b4) = prepped_params

    B, dx = x_input.shape
    assert observations.shape == (B, 1) and t.shape == (B, 1)
    out_dim = w4.shape[1]

    x_input = x_input.astype(jnp.float32)
    observations = observations.astype(jnp.float32)
    t = t.astype(jnp.float32)

    # Tile sizing: >= 2 grid steps (lets v7x shard tiles across both
    # TensorCores), tile capped at `tile_b`, multiple of 8 sublanes, minimal
    # tail padding.
    steps = 2 * max(1, _cdiv(B, 2 * tile_b))
    tb = _round_up(_cdiv(B, steps), 8)
    b_pad = _round_up(B, tb)
    grid = (b_pad // tb,)

    if b_pad != B:
        # Small row-pad of the narrow inputs so every tile is in-bounds.
        pad = ((0, b_pad - B), (0, 0))
        x_input = jnp.pad(x_input, pad)
        observations = jnp.pad(observations, pad)
        t = jnp.pad(t, pad)

    stream = lambda i: (i, 0)      # batch-tiled operands (activations, output)
    resident = lambda i: (0, 0)    # weights/biases: same block every step -> DMA'd once

    out = pl.pallas_call(
        mlp_kernel,
        out_shape=jax.ShapeDtypeStruct((b_pad, out_dim), jnp.float32),
        grid=grid,
        in_specs=[
            pl.BlockSpec((tb, dx), stream),
            pl.BlockSpec((tb, 1), stream),
            pl.BlockSpec((tb, 1), stream),
            pl.BlockSpec(w1x.shape, resident),
            pl.BlockSpec(w1o.shape, resident),
            pl.BlockSpec(w1t.shape, resident),
            pl.BlockSpec(b1.shape, resident),
            pl.BlockSpec(w2.shape, resident),
            pl.BlockSpec(b2.shape, resident),
            pl.BlockSpec(w3.shape, resident),
            pl.BlockSpec(b3.shape, resident),
            pl.BlockSpec(w4.shape, resident),
            pl.BlockSpec(b4.shape, resident),
        ],
        out_specs=pl.BlockSpec((tb, out_dim), stream),
        compiler_params=pltpu.CompilerParams(
            dimension_semantics=("parallel",)),
    )(x_input, observations, t,
      w1x, w1o, w1t, b1, w2, b2, w3, b3, w4, b4)

    if b_pad != B:
        out = out[:B]
    return out


def init_params(key, in_features, hidden_dims, out_dim):
    """Deterministic synthetic params (f32). Weights (in, out), biases (1, out)."""
    dims = [in_features] + list(hidden_dims) + [out_dim]
    params = []
    for i in range(len(dims) - 1):
        key, kw, kb = jax.random.split(key, 3)
        bound = 1.0 / jnp.sqrt(dims[i])  # nn.Linear default init scale
        w = jax.random.uniform(kw, (dims[i], dims[i + 1]),
                               minval=-bound, maxval=bound, dtype=jnp.float32)
        b = jax.random.uniform(kb, (1, dims[i + 1]),
                               minval=-bound, maxval=bound, dtype=jnp.float32)
        params.append((w, b))
    return params


def reference_forward(x_input, observations, t, params):
    """Pure-JAX f32 reference for correctness check."""
    h = jnp.concatenate([x_input, observations, t], axis=1)
    (w1, b1), (w2, b2), (w3, b3), (w4, b4) = params
    h = jnp.tanh(h @ w1 + b1)
    h = jnp.tanh(h @ w2 + b2)
    h = jnp.tanh(h @ w3 + b3)
    return h @ w4 + b4


if __name__ == "__main__":
    # Small shapes consistent with the module's forward:
    #   x_input: (B, input_dim), observations: (B, 1), t: (B, 1)
    #   first Linear in_features = input_dim + 2.
    batch = 40
    input_dim = 4
    hidden_dims = [32, 32, 32]
    output_dim = 4

    key = jax.random.PRNGKey(0)
    k_x, k_obs, k_t, k_p = jax.random.split(key, 4)

    x_input = jax.random.normal(k_x, (batch, input_dim), dtype=jnp.float32)
    observations = jax.random.normal(k_obs, (batch, 1), dtype=jnp.float32)
    t = jax.random.uniform(k_t, (batch, 1), dtype=jnp.float32)

    params = init_params(k_p, input_dim + 2, hidden_dims, output_dim)
    prepped = prepare_params(params, input_dim)
    ref = reference_forward(x_input, observations, t, params)

    # Default tiling (2 grid steps, small tail pad).
    out = jax.block_until_ready(mlp_forward(x_input, observations, t, prepped))
    assert out.shape == (batch, output_dim), out.shape
    err = float(jnp.max(jnp.abs(out - ref)))
    assert err < 1e-2, f"mismatch vs JAX reference, max abs diff = {err}"

    # Small tiles: exercises a multi-step grid with resident weights and no padding.
    out2 = jax.block_until_ready(
        mlp_forward(x_input, observations, t, prepped, tile_b=8))
    err2 = float(jnp.max(jnp.abs(out2 - ref)))
    assert err2 < 1e-2, f"mismatch (small tiles), max abs diff = {err2}"

    print("KERNEL_OK")
</pallas_src>

<mosaic_0001>
module attributes {stable_mosaic.version = 11 : i64} {
  func.func @mlp_kernel(%arg0: i32, %arg1: memref<24x4xf32, #tpu.memory_space<vmem>>, %arg2: memref<24x1xf32, #tpu.memory_space<vmem>>, %arg3: memref<24x1xf32, #tpu.memory_space<vmem>>, %arg4: memref<4x32xf32, #tpu.memory_space<vmem>>, %arg5: memref<1x32xf32, #tpu.memory_space<vmem>>, %arg6: memref<1x32xf32, #tpu.memory_space<vmem>>, %arg7: memref<1x32xf32, #tpu.memory_space<vmem>>, %arg8: memref<32x32xf32, #tpu.memory_space<vmem>>, %arg9: memref<1x32xf32, #tpu.memory_space<vmem>>, %arg10: memref<32x32xf32, #tpu.memory_space<vmem>>, %arg11: memref<1x32xf32, #tpu.memory_space<vmem>>, %arg12: memref<32x4xf32, #tpu.memory_space<vmem>>, %arg13: memref<1x4xf32, #tpu.memory_space<vmem>>, %arg14: memref<24x4xf32, #tpu.memory_space<vmem>>) attributes {dimension_semantics = [#tpu.dimension_semantics<parallel>], iteration_bounds = array<i64: 2>, scalar_prefetch = 0 : i64, scratch_operands = 0 : i64, tpu.core_type = #tpu.core_type<tc>, window_params = [{transform_indices = @transform_0, window_bounds = array<i64: 24, 4>}, {transform_indices = @transform_1, window_bounds = array<i64: 24, 1>}, {transform_indices = @transform_2, window_bounds = array<i64: 24, 1>}, {pipeline_mode = #tpu.pipeline_mode<synchronous>, transform_indices = @transform_3, window_bounds = array<i64: 4, 32>}, {pipeline_mode = #tpu.pipeline_mode<synchronous>, transform_indices = @transform_4, window_bounds = array<i64: 1, 32>}, {pipeline_mode = #tpu.pipeline_mode<synchronous>, transform_indices = @transform_5, window_bounds = array<i64: 1, 32>}, {pipeline_mode = #tpu.pipeline_mode<synchronous>, transform_indices = @transform_6, window_bounds = array<i64: 1, 32>}, {pipeline_mode = #tpu.pipeline_mode<synchronous>, transform_indices = @transform_7, window_bounds = array<i64: 32, 32>}, {pipeline_mode = #tpu.pipeline_mode<synchronous>, transform_indices = @transform_8, window_bounds = array<i64: 1, 32>}, {pipeline_mode = #tpu.pipeline_mode<synchronous>, transform_indices = @transform_9, window_bounds = array<i64: 32, 32>}, {pipeline_mode = #tpu.pipeline_mode<synchronous>, transform_indices = @transform_10, window_bounds = array<i64: 1, 32>}, {pipeline_mode = #tpu.pipeline_mode<synchronous>, transform_indices = @transform_11, window_bounds = array<i64: 32, 4>}, {pipeline_mode = #tpu.pipeline_mode<synchronous>, transform_indices = @transform_12, window_bounds = array<i64: 1, 4>}, {transform_indices = @transform_13, window_bounds = array<i64: 24, 4>}]} {
    %c0 = arith.constant 0 : index
    %c0_0 = arith.constant 0 : index
    %0 = vector.load %arg1[%c0, %c0_0] : memref<24x4xf32, #tpu.memory_space<vmem>>, vector<24x4xf32>
    %c0_1 = arith.constant 0 : index
    %c0_2 = arith.constant 0 : index
    %1 = vector.load %arg4[%c0_1, %c0_2] : memref<4x32xf32, #tpu.memory_space<vmem>>, vector<4x32xf32>
    %cst = arith.constant dense<0.000000e+00> : vector<24x32xf32>
    %2 = tpu.matmul %0, %1, %cst {dimension_numbers = #tpu.dot_dimension_numbers<[1], [0], [0], [1], [0, 0, 1, 1], [], []>} : vector<24x4xf32>, vector<4x32xf32>, vector<24x32xf32> -> vector<24x32xf32>
    %c0_3 = arith.constant 0 : index
    %c0_4 = arith.constant 0 : index
    %3 = vector.load %arg2[%c0_3, %c0_4] : memref<24x1xf32, #tpu.memory_space<vmem>>, vector<24x1xf32>
    %c0_5 = arith.constant 0 : index
    %c0_6 = arith.constant 0 : index
    %4 = vector.load %arg5[%c0_5, %c0_6] : memref<1x32xf32, #tpu.memory_space<vmem>>, vector<1x32xf32>
    %5 = vector.broadcast %3 : vector<24x1xf32> to vector<24x32xf32>
    %6 = vector.broadcast %4 : vector<1x32xf32> to vector<24x32xf32>
    %7 = arith.mulf %5, %6 : vector<24x32xf32>
    %8 = arith.addf %2, %7 : vector<24x32xf32>
    %c0_7 = arith.constant 0 : index
    %c0_8 = arith.constant 0 : index
    %9 = vector.load %arg3[%c0_7, %c0_8] : memref<24x1xf32, #tpu.memory_space<vmem>>, vector<24x1xf32>
    %c0_9 = arith.constant 0 : index
    %c0_10 = arith.constant 0 : index
    %10 = vector.load %arg6[%c0_9, %c0_10] : memref<1x32xf32, #tpu.memory_space<vmem>>, vector<1x32xf32>
    %11 = vector.broadcast %9 : vector<24x1xf32> to vector<24x32xf32>
    %12 = vector.broadcast %10 : vector<1x32xf32> to vector<24x32xf32>
    %13 = arith.mulf %11, %12 : vector<24x32xf32>
    %14 = arith.addf %8, %13 : vector<24x32xf32>
    %c0_11 = arith.constant 0 : index
    %c0_12 = arith.constant 0 : index
    %15 = vector.load %arg7[%c0_11, %c0_12] : memref<1x32xf32, #tpu.memory_space<vmem>>, vector<1x32xf32>
    %16 = vector.broadcast %15 : vector<1x32xf32> to vector<24x32xf32>
    %17 = arith.addf %14, %16 : vector<24x32xf32>
    %18 = math.tanh %17 : vector<24x32xf32>
    %c0_13 = arith.constant 0 : index
    %c0_14 = arith.constant 0 : index
    %19 = vector.load %arg8[%c0_13, %c0_14] : memref<32x32xf32, #tpu.memory_space<vmem>>, vector<32x32xf32>
    %cst_15 = arith.constant dense<0.000000e+00> : vector<24x32xf32>
    %20 = tpu.matmul %18, %19, %cst_15 {dimension_numbers = #tpu.dot_dimension_numbers<[1], [0], [0], [1], [0, 0, 1, 1], [], []>} : vector<24x32xf32>, vector<32x32xf32>, vector<24x32xf32> -> vector<24x32xf32>
    %c0_16 = arith.constant 0 : index
    %c0_17 = arith.constant 0 : index
    %21 = vector.load %arg9[%c0_16, %c0_17] : memref<1x32xf32, #tpu.memory_space<vmem>>, vector<1x32xf32>
    %22 = vector.broadcast %21 : vector<1x32xf32> to vector<24x32xf32>
    %23 = arith.addf %20, %22 : vector<24x32xf32>
    %24 = math.tanh %23 : vector<24x32xf32>
    %c0_18 = arith.constant 0 : index
    %c0_19 = arith.constant 0 : index
    %25 = vector.load %arg10[%c0_18, %c0_19] : memref<32x32xf32, #tpu.memory_space<vmem>>, vector<32x32xf32>
    %cst_20 = arith.constant dense<0.000000e+00> : vector<24x32xf32>
    %26 = tpu.matmul %24, %25, %cst_20 {dimension_numbers = #tpu.dot_dimension_numbers<[1], [0], [0], [1], [0, 0, 1, 1], [], []>} : vector<24x32xf32>, vector<32x32xf32>, vector<24x32xf32> -> vector<24x32xf32>
    %c0_21 = arith.constant 0 : index
    %c0_22 = arith.constant 0 : index
    %27 = vector.load %arg11[%c0_21, %c0_22] : memref<1x32xf32, #tpu.memory_space<vmem>>, vector<1x32xf32>
    %28 = vector.broadcast %27 : vector<1x32xf32> to vector<24x32xf32>
    %29 = arith.addf %26, %28 : vector<24x32xf32>
    %30 = math.tanh %29 : vector<24x32xf32>
    %c0_23 = arith.constant 0 : index
    %c0_24 = arith.constant 0 : index
    %31 = vector.load %arg12[%c0_23, %c0_24] : memref<32x4xf32, #tpu.memory_space<vmem>>, vector<32x4xf32>
    %cst_25 = arith.constant dense<0.000000e+00> : vector<24x4xf32>
    %32 = tpu.matmul %30, %31, %cst_25 {dimension_numbers = #tpu.dot_dimension_numbers<[1], [0], [0], [1], [0, 0, 1, 1], [], []>} : vector<24x32xf32>, vector<32x4xf32>, vector<24x4xf32> -> vector<24x4xf32>
    %c0_26 = arith.constant 0 : index
    %c0_27 = arith.constant 0 : index
    %33 = vector.load %arg13[%c0_26, %c0_27] : memref<1x4xf32, #tpu.memory_space<vmem>>, vector<1x4xf32>
    %34 = vector.broadcast %33 : vector<1x4xf32> to vector<24x4xf32>
    %35 = arith.addf %32, %34 : vector<24x4xf32>
    %c0_28 = arith.constant 0 : index
    %c0_29 = arith.constant 0 : index
    %36 = vector.load %arg14[%c0_28, %c0_29] : memref<24x4xf32, #tpu.memory_space<vmem>>, vector<24x4xf32>
    tpu.vector_store %arg14[%c0_28, %c0_29], %35 {strides = array<i32>} : memref<24x4xf32, #tpu.memory_space<vmem>>, vector<24x4xf32>,
    return
  }
  func.func @transform_0(%arg0: i32) -> (i32, i32) {
    %c0_i32 = arith.constant 0 : i32
    %c0_i32_0 = arith.constant 0 : i32
    return %arg0, %c0_i32 : i32, i32
  }
  func.func @transform_1(%arg0: i32) -> (i32, i32) {
    %c0_i32 = arith.constant 0 : i32
    %c0_i32_0 = arith.constant 0 : i32
    return %arg0, %c0_i32 : i32, i32
  }
  func.func @transform_2(%arg0: i32) -> (i32, i32) {
    %c0_i32 = arith.constant 0 : i32
    %c0_i32_0 = arith.constant 0 : i32
    return %arg0, %c0_i32 : i32, i32
  }
  func.func @transform_3(%arg0: i32) -> (i32, i32) {
    %c0_i32 = arith.constant 0 : i32
    %c0_i32_0 = arith.constant 0 : i32
    %c0_i32_1 = arith.constant 0 : i32
    return %c0_i32, %c0_i32_0 : i32, i32
  }
  func.func @transform_4(%arg0: i32) -> (i32, i32) {
    %c0_i32 = arith.constant 0 : i32
    %c0_i32_0 = arith.constant 0 : i32
    %c0_i32_1 = arith.constant 0 : i32
    return %c0_i32, %c0_i32_0 : i32, i32
  }
  func.func @transform_5(%arg0: i32) -> (i32, i32) {
    %c0_i32 = arith.constant 0 : i32
    %c0_i32_0 = arith.constant 0 : i32
    %c0_i32_1 = arith.constant 0 : i32
    return %c0_i32, %c0_i32_0 : i32, i32
  }
  func.func @transform_6(%arg0: i32) -> (i32, i32) {
    %c0_i32 = arith.constant 0 : i32
    %c0_i32_0 = arith.constant 0 : i32
    %c0_i32_1 = arith.constant 0 : i32
    return %c0_i32, %c0_i32_0 : i32, i32
  }
  func.func @transform_7(%arg0: i32) -> (i32, i32) {
    %c0_i32 = arith.constant 0 : i32
    %c0_i32_0 = arith.constant 0 : i32
    %c0_i32_1 = arith.constant 0 : i32
    return %c0_i32, %c0_i32_0 : i32, i32
  }
  func.func @transform_8(%arg0: i32) -> (i32, i32) {
    %c0_i32 = arith.constant 0 : i32
    %c0_i32_0 = arith.constant 0 : i32
    %c0_i32_1 = arith.constant 0 : i32
    return %c0_i32, %c0_i32_0 : i32, i32
  }
  func.func @transform_9(%arg0: i32) -> (i32, i32) {
    %c0_i32 = arith.constant 0 : i32
    %c0_i32_0 = arith.constant 0 : i32
    %c0_i32_1 = arith.constant 0 : i32
    return %c0_i32, %c0_i32_0 : i32, i32
  }
  func.func @transform_10(%arg0: i32) -> (i32, i32) {
    %c0_i32 = arith.constant 0 : i32
    %c0_i32_0 = arith.constant 0 : i32
    %c0_i32_1 = arith.constant 0 : i32
    return %c0_i32, %c0_i32_0 : i32, i32
  }
  func.func @transform_11(%arg0: i32) -> (i32, i32) {
    %c0_i32 = arith.constant 0 : i32
    %c0_i32_0 = arith.constant 0 : i32
    %c0_i32_1 = arith.constant 0 : i32
    return %c0_i32, %c0_i32_0 : i32, i32
  }
  func.func @transform_12(%arg0: i32) -> (i32, i32) {
    %c0_i32 = arith.constant 0 : i32
    %c0_i32_0 = arith.constant 0 : i32
    %c0_i32_1 = arith.constant 0 : i32
    return %c0_i32, %c0_i32_0 : i32, i32
  }
  func.func @transform_13(%arg0: i32) -> (i32, i32) {
    %c0_i32 = arith.constant 0 : i32
    %c0_i32_0 = arith.constant 0 : i32
    return %arg0, %c0_i32 : i32, i32
  }
}

</mosaic_0001>

<llo_original>
// kernel: tpu_custom_call.1
$region0: #{tpu_custom_call.1}
  #allocation0 [shape = 'u32[]', space=smem, size = 0x4, offset = 0x4, fixed_abs, tag = 'smem constant byte address 0x4 - core index']
  #allocation1 [shape = 'u32[144,128]{1,0:T(1,128)}', space=vmem, size = 0x12000, scoped, tag = 'internal scratch']
  %s0 = inlined_call_operand.vmem [shape: f32[48,4], index: 0, kind: input, shape index: {}]
  %s1 = inlined_call_operand.vmem [shape: f32[48,1], index: 1, kind: input, shape index: {}]
  %s2 = inlined_call_operand.vmem [shape: f32[48,1], index: 2, kind: input, shape index: {}]
  %s3 = inlined_call_operand.vmem [shape: f32[4,32], index: 3, kind: input, shape index: {}]
  %s4 = inlined_call_operand.vmem [shape: f32[1,32], index: 4, kind: input, shape index: {}]
  %s5 = inlined_call_operand.vmem [shape: f32[1,32], index: 5, kind: input, shape index: {}]
  %s6 = inlined_call_operand.vmem [shape: f32[1,32], index: 6, kind: input, shape index: {}]
  %s7 = inlined_call_operand.vmem [shape: f32[32,32], index: 7, kind: input, shape index: {}]
  %s8 = inlined_call_operand.vmem [shape: f32[1,32], index: 8, kind: input, shape index: {}]
  %s9 = inlined_call_operand.vmem [shape: f32[32,32], index: 9, kind: input, shape index: {}]
  %s10 = inlined_call_operand.vmem [shape: f32[1,32], index: 10, kind: input, shape index: {}]
  %s11 = inlined_call_operand.vmem [shape: f32[32,4], index: 11, kind: input, shape index: {}]
  %s12 = inlined_call_operand.vmem [shape: f32[1,4], index: 12, kind: input, shape index: {}]
  %s13 = inlined_call_operand.vmem [shape: f32[48,4], index: 13, kind: output, shape index: {}]
  %s14 = sld [smem:[#allocation0]]
  $region85: #{tpu_custom_call.1} parent=0
    _
  %s16 = ssub.s32 1, %s14
  %s17 = scalar_select 0, %s16, %s14
  loop: start=0, step=1, limit=4
  $region2: #{tpu_custom_call.1} parent=0 // loop_pre_header
    _
  $region3: #{tpu_custom_call.1} parent=0 // loop_header
    %s19 = sphi 0, %s23
    %p20 = scmp.ge.s32.totalorder %s19, 4
    %s29 = sphi 0, %s31
    %s32 = sphi 0, %s29
    %s33 = sphi 0, %s32
    %s49 = sphi 0, %s33
    %s55 = sphi 0, %s57
    %s58 = sphi 0, %s55
    %s59 = sphi 0, %s58
    %s75 = sphi 0, %s59
    %s81 = sphi 0, %s83
    %s84 = sphi 0, %s81
    %s85 = sphi 0, %s84
    %s101 = sphi 0, %s85
    %s105 = sphi 0, %s105
    %s107 = sphi 0, %s105
    %s108 = sphi 0, %s107
    %s122 = sphi 0, %s108
    %s126 = sphi 0, %s126
    %s128 = sphi 0, %s126
    %s129 = sphi 0, %s128
    %s143 = sphi 0, %s129
    %s147 = sphi 0, %s147
    %s149 = sphi 0, %s147
    %s150 = sphi 0, %s149
    %s164 = sphi 0, %s150
    %s168 = sphi 0, %s168
    %s170 = sphi 0, %s168
    %s171 = sphi 0, %s170
    %s185 = sphi 0, %s171
    %s189 = sphi 0, %s189
    %s191 = sphi 0, %s189
    %s192 = sphi 0, %s191
    %s206 = sphi 0, %s192
    %s210 = sphi 0, %s210
    %s212 = sphi 0, %s210
    %s213 = sphi 0, %s212
    %s227 = sphi 0, %s213
    %s231 = sphi 0, %s231
    %s233 = sphi 0, %s231
    %s234 = sphi 0, %s233
    %s248 = sphi 0, %s234
    %s252 = sphi 0, %s252
    %s254 = sphi 0, %s252
    %s255 = sphi 0, %s254
    %s269 = sphi 0, %s255
    %s273 = sphi 0, %s273
    %s275 = sphi 0, %s273
    %s276 = sphi 0, %s275
    %s290 = sphi 0, %s276
    %s294 = sphi 0, %s294
    %s296 = sphi 0, %s294
    %s297 = sphi 0, %s296
    %s311 = sphi 0, %s297
    %s317 = sphi 0, %s319
    %s320 = sphi 0, %s317
    %s321 = sphi 0, %s320
    %s337 = sphi 0, %s321
  $region4: #{tpu_custom_call.1} parent=0 // loop_header_branch
    %22 = sbr.rel (%p20) target = $region8
  $region5: #{tpu_custom_call.1} parent=0 // loop_body
    %s24 = ssub.s32 %s19, 1
    %s25 = ssub.s32 %s19, 2
    %s26 = sadd.s32 %s19, 1
    %s27 = ssub.s32 %s19, %s26
    %p28 = scmp.eq.s32.totalorder %s27, 0
    %s30 = sadd.s32 %s29, 1
    %s31 = scalar_select %p28, %s29, %s30
    %p34 = pneg %p28
    %p35 = scmp.eq.s32.totalorder %s19, 1
    %p36 = por %p34, %p35
    %p37 = scmp.ne.s32.totalorder %s29, %s32
    %p38 = scmp.eq.s32.totalorder %s19, 0
    %p39 = por %p37, %p38
    %p40 = scmp.ne.s32.totalorder %s29, %s32
    %p41 = scmp.eq.s32.totalorder %s24, 1
    %p42 = por %p40, %p41
    %p43 = scmp.ne.s32.totalorder %s32, %s33
    %p44 = scmp.eq.s32.totalorder %s24, 0
    %p45 = por %p43, %p44
    %p46 = scmp.ne.s32.totalorder %s32, %s33
    %p47 = scmp.eq.s32.totalorder %s25, 1
    %p48 = por %p46, %p47
    %p50 = scmp.ne.s32.totalorder %s33, %s49
    %p51 = scmp.eq.s32.totalorder %s25, 0
    %p52 = por %p50, %p51
    %s53 = ssub.s32 %s19, %s26
    %p54 = scmp.eq.s32.totalorder %s53, 0
    %s56 = sadd.s32 %s55, 1
    %s57 = scalar_select %p54, %s55, %s56
    %p60 = pneg %p54
    %p61 = scmp.eq.s32.totalorder %s19, 1
    %p62 = por %p60, %p61
    %p63 = scmp.ne.s32.totalorder %s55, %s58
    %p64 = scmp.eq.s32.totalorder %s19, 0
    %p65 = por %p63, %p64
    %p66 = scmp.ne.s32.totalorder %s55, %s58
    %p67 = scmp.eq.s32.totalorder %s24, 1
    %p68 = por %p66, %p67
    %p69 = scmp.ne.s32.totalorder %s58, %s59
    %p70 = scmp.eq.s32.totalorder %s24, 0
    %p71 = por %p69, %p70
    %p72 = scmp.ne.s32.totalorder %s58, %s59
    %p73 = scmp.eq.s32.totalorder %s25, 1
    %p74 = por %p72, %p73
    %p76 = scmp.ne.s32.totalorder %s59, %s75
    %p77 = scmp.eq.s32.totalorder %s25, 0
    %p78 = por %p76, %p77
    %s79 = ssub.s32 %s19, %s26
    %p80 = scmp.eq.s32.totalorder %s79, 0
    %s82 = sadd.s32 %s81, 1
    %s83 = scalar_select %p80, %s81, %s82
    %p86 = pneg %p80
    %p87 = scmp.eq.s32.totalorder %s19, 1
    %p88 = por %p86, %p87
    %p89 = scmp.ne.s32.totalorder %s81, %s84
    %p90 = scmp.eq.s32.totalorder %s19, 0
    %p91 = por %p89, %p90
    %p92 = scmp.ne.s32.totalorder %s81, %s84
    %p93 = scmp.eq.s32.totalorder %s24, 1
    %p94 = por %p92, %p93
    %p95 = scmp.ne.s32.totalorder %s84, %s85
    %p96 = scmp.eq.s32.totalorder %s24, 0
    %p97 = por %p95, %p96
    %p98 = scmp.ne.s32.totalorder %s84, %s85
    %p99 = scmp.eq.s32.totalorder %s25, 1
    %p100 = por %p98, %p99
    %p102 = scmp.ne.s32.totalorder %s85, %s101
    %p103 = scmp.eq.s32.totalorder %s25, 0
    %p104 = por %p102, %p103
    %s106 = sadd.s32 %s105, 1
    %p109 = scmp.eq.s32.totalorder %s19, 1
    %p110 = scmp.ne.s32.totalorder %s105, %s107
    %p111 = scmp.eq.s32.totalorder %s19, 0
    %p112 = por %p110, %p111
    %p113 = scmp.ne.s32.totalorder %s105, %s107
    %p114 = scmp.eq.s32.totalorder %s24, 1
    %p115 = por %p113, %p114
    %p116 = scmp.ne.s32.totalorder %s107, %s108
    %p117 = scmp.eq.s32.totalorder %s24, 0
    %p118 = por %p116, %p117
    %p119 = scmp.ne.s32.totalorder %s107, %s108
    %p120 = scmp.eq.s32.totalorder %s25, 1
    %p121 = por %p119, %p120
    %p123 = scmp.ne.s32.totalorder %s108, %s122
    %p124 = scmp.eq.s32.totalorder %s25, 0
    %p125 = por %p123, %p124
    %s127 = sadd.s32 %s126, 1
    %p130 = scmp.eq.s32.totalorder %s19, 1
    %p131 = scmp.ne.s32.totalorder %s126, %s128
    %p132 = scmp.eq.s32.totalorder %s19, 0
    %p133 = por %p131, %p132
    %p134 = scmp.ne.s32.totalorder %s126, %s128
    %p135 = scmp.eq.s32.totalorder %s24, 1
    %p136 = por %p134, %p135
    %p137 = scmp.ne.s32.totalorder %s128, %s129
    %p138 = scmp.eq.s32.totalorder %s24, 0
    %p139 = por %p137, %p138
    %p140 = scmp.ne.s32.totalorder %s128, %s129
    %p141 = scmp.eq.s32.totalorder %s25, 1
    %p142 = por %p140, %p141
    %p144 = scmp.ne.s32.totalorder %s129, %s143
    %p145 = scmp.eq.s32.totalorder %s25, 0
    %p146 = por %p144, %p145
    %s148 = sadd.s32 %s147, 1
    %p151 = scmp.eq.s32.totalorder %s19, 1
    %p152 = scmp.ne.s32.totalorder %s147, %s149
    %p153 = scmp.eq.s32.totalorder %s19, 0
    %p154 = por %p152, %p153
    %p155 = scmp.ne.s32.totalorder %s147, %s149
    %p156 = scmp.eq.s32.totalorder %s24, 1
    %p157 = por %p155, %p156
    %p158 = scmp.ne.s32.totalorder %s149, %s150
    %p159 = scmp.eq.s32.totalorder %s24, 0
    %p160 = por %p158, %p159
    %p161 = scmp.ne.s32.totalorder %s149, %s150
    %p162 = scmp.eq.s32.totalorder %s25, 1
    %p163 = por %p161, %p162
    %p165 = scmp.ne.s32.totalorder %s150, %s164
    %p166 = scmp.eq.s32.totalorder %s25, 0
    %p167 = por %p165, %p166
    %s169 = sadd.s32 %s168, 1
    %p172 = scmp.eq.s32.totalorder %s19, 1
    %p173 = scmp.ne.s32.totalorder %s168, %s170
    %p174 = scmp.eq.s32.totalorder %s19, 0
    %p175 = por %p173, %p174
    %p176 = scmp.ne.s32.totalorder %s168, %s170
    %p177 = scmp.eq.s32.totalorder %s24, 1
    %p178 = por %p176, %p177
    %p179 = scmp.ne.s32.totalorder %s170, %s171
    %p180 = scmp.eq.s32.totalorder %s24, 0
    %p181 = por %p179, %p180
    %p182 = scmp.ne.s32.totalorder %s170, %s171
    %p183 = scmp.eq.s32.totalorder %s25, 1
    %p184 = por %p182, %p183
    %p186 = scmp.ne.s32.totalorder %s171, %s185
    %p187 = scmp.eq.s32.totalorder %s25, 0
    %p188 = por %p186, %p187
    %s190 = sadd.s32 %s189, 1
    %p193 = scmp.eq.s32.totalorder %s19, 1
    %p194 = scmp.ne.s32.totalorder %s189, %s191
    %p195 = scmp.eq.s32.totalorder %s19, 0
    %p196 = por %p194, %p195
    %p197 = scmp.ne.s32.totalorder %s189, %s191
    %p198 = scmp.eq.s32.totalorder %s24, 1
    %p199 = por %p197, %p198
    %p200 = scmp.ne.s32.totalorder %s191, %s192
    %p201 = scmp.eq.s32.totalorder %s24, 0
    %p202 = por %p200, %p201
    %p203 = scmp.ne.s32.totalorder %s191, %s192
    %p204 = scmp.eq.s32.totalorder %s25, 1
    %p205 = por %p203, %p204
    %p207 = scmp.ne.s32.totalorder %s192, %s206
    %p208 = scmp.eq.s32.totalorder %s25, 0
    %p209 = por %p207, %p208
    %s211 = sadd.s32 %s210, 1
    %p214 = scmp.eq.s32.totalorder %s19, 1
    %p215 = scmp.ne.s32.totalorder %s210, %s212
    %p216 = scmp.eq.s32.totalorder %s19, 0
    %p217 = por %p215, %p216
    %p218 = scmp.ne.s32.totalorder %s210, %s212
    %p219 = scmp.eq.s32.totalorder %s24, 1
    %p220 = por %p218, %p219
    %p221 = scmp.ne.s32.totalorder %s212, %s213
    %p222 = scmp.eq.s32.totalorder %s24, 0
    %p223 = por %p221, %p222
    %p224 = scmp.ne.s32.totalorder %s212, %s213
    %p225 = scmp.eq.s32.totalorder %s25, 1
    %p226 = por %p224, %p225
    %p228 = scmp.ne.s32.totalorder %s213, %s227
    %p229 = scmp.eq.s32.totalorder %s25, 0
    %p230 = por %p228, %p229
    %s232 = sadd.s32 %s231, 1
    %p235 = scmp.eq.s32.totalorder %s19, 1
    %p236 = scmp.ne.s32.totalorder %s231, %s233
    %p237 = scmp.eq.s32.totalorder %s19, 0
    %p238 = por %p236, %p237
    %p239 = scmp.ne.s32.totalorder %s231, %s233
    %p240 = scmp.eq.s32.totalorder %s24, 1
    %p241 = por %p239, %p240
    %p242 = scmp.ne.s32.totalorder %s233, %s234
    %p243 = scmp.eq.s32.totalorder %s24, 0
    %p244 = por %p242, %p243
    %p245 = scmp.ne.s32.totalorder %s233, %s234
    %p246 = scmp.eq.s32.totalorder %s25, 1
    %p247 = por %p245, %p246
    %p249 = scmp.ne.s32.totalorder %s234, %s248
    %p250 = scmp.eq.s32.totalorder %s25, 0
    %p251 = por %p249, %p250
    %s253 = sadd.s32 %s252, 1
    %p256 = scmp.eq.s32.totalorder %s19, 1
    %p257 = scmp.ne.s32.totalorder %s252, %s254
    %p258 = scmp.eq.s32.totalorder %s19, 0
    %p259 = por %p257, %p258
    %p260 = scmp.ne.s32.totalorder %s252, %s254
    %p261 = scmp.eq.s32.totalorder %s24, 1
    %p262 = por %p260, %p261
    %p263 = scmp.ne.s32.totalorder %s254, %s255
    %p264 = scmp.eq.s32.totalorder %s24, 0
    %p265 = por %p263, %p264
    %p266 = scmp.ne.s32.totalorder %s254, %s255
    %p267 = scmp.eq.s32.totalorder %s25, 1
    %p268 = por %p266, %p267
    %p270 = scmp.ne.s32.totalorder %s255, %s269
    %p271 = scmp.eq.s32.totalorder %s25, 0
    %p272 = por %p270, %p271
    %s274 = sadd.s32 %s273, 1
    %p277 = scmp.eq.s32.totalorder %s19, 1
    %p278 = scmp.ne.s32.totalorder %s273, %s275
    %p279 = scmp.eq.s32.totalorder %s19, 0
    %p280 = por %p278, %p279
    %p281 = scmp.ne.s32.totalorder %s273, %s275
    %p282 = scmp.eq.s32.totalorder %s24, 1
    %p283 = por %p281, %p282
    %p284 = scmp.ne.s32.totalorder %s275, %s276
    %p285 = scmp.eq.s32.totalorder %s24, 0
    %p286 = por %p284, %p285
    %p287 = scmp.ne.s32.totalorder %s275, %s276
    %p288 = scmp.eq.s32.totalorder %s25, 1
    %p289 = por %p287, %p288
    %p291 = scmp.ne.s32.totalorder %s276, %s290
    %p292 = scmp.eq.s32.totalorder %s25, 0
    %p293 = por %p291, %p292
    %s295 = sadd.s32 %s294, 1
    %p298 = scmp.eq.s32.totalorder %s19, 1
    %p299 = scmp.ne.s32.totalorder %s294, %s296
    %p300 = scmp.eq.s32.totalorder %s19, 0
    %p301 = por %p299, %p300
    %p302 = scmp.ne.s32.totalorder %s294, %s296
    %p303 = scmp.eq.s32.totalorder %s24, 1
    %p304 = por %p302, %p303
    %p305 = scmp.ne.s32.totalorder %s296, %s297
    %p306 = scmp.eq.s32.totalorder %s24, 0
    %p307 = por %p305, %p306
    %p308 = scmp.ne.s32.totalorder %s296, %s297
    %p309 = scmp.eq.s32.totalorder %s25, 1
    %p310 = por %p308, %p309
    %p312 = scmp.ne.s32.totalorder %s297, %s311
    %p313 = scmp.eq.s32.totalorder %s25, 0
    %p314 = por %p312, %p313
    %s315 = ssub.s32 %s19, %s26
    %p316 = scmp.eq.s32.totalorder %s315, 0
    %s318 = sadd.s32 %s317, 1
    %s319 = scalar_select %p316, %s317, %s318
    %p322 = pneg %p316
    %p323 = scmp.eq.s32.totalorder %s19, 1
    %p324 = por %p322, %p323
    %p325 = scmp.ne.s32.totalorder %s317, %s320
    %p326 = scmp.eq.s32.totalorder %s19, 0
    %p327 = por %p325, %p326
    %p328 = scmp.ne.s32.totalorder %s317, %s320
    %p329 = scmp.eq.s32.totalorder %s24, 1
    %p330 = por %p328, %p329
    %p331 = scmp.ne.s32.totalorder %s320, %s321
    %p332 = scmp.eq.s32.totalorder %s24, 0
    %p333 = por %p331, %p332
    %p334 = scmp.ne.s32.totalorder %s320, %s321
    %p335 = scmp.eq.s32.totalorder %s25, 1
    %p336 = por %p334, %p335
    %p338 = scmp.ne.s32.totalorder %s321, %s337
    %p339 = scmp.eq.s32.totalorder %s25, 0
    %p340 = por %p338, %p339
    %p341 = scmp.le.s32.totalorder 1, %s19
    %p342 = scmp.lt.s32.totalorder %s19, 3
    %p343 = pnand %p341, %p342
    %p344 = pneg %p343
    // Predicated region
    $region9: #{tpu_custom_call.1} parent=5 // pred_check
      _
    $region10: #{tpu_custom_call.1} parent=5 // pred_check_branch
      %346 = sbr.rel (%p343) target = $region12
    $region11: #{tpu_custom_call.1} parent=5 // pred_region
      %s347 = ssub.s32 %s19, 1
      // Predicated region
      $region13: #{tpu_custom_call.1} parent=11 // pred_check
        %p348 = pneg %p118
      $region14: #{tpu_custom_call.1} parent=11 // pred_check_branch
        %350 = sbr.rel (%p348) target = $region16
      $region15: #{tpu_custom_call.1} parent=11 // pred_region
        _
      $region16: #{tpu_custom_call.1} parent=11 // pred_fallthru
        _
      // Predicated region
      $region17: #{tpu_custom_call.1} parent=11 // pred_check
        %p351 = pneg %p139
      $region18: #{tpu_custom_call.1} parent=11 // pred_check_branch
        %353 = sbr.rel (%p351) target = $region20
      $region19: #{tpu_custom_call.1} parent=11 // pred_region
        _
      $region20: #{tpu_custom_call.1} parent=11 // pred_fallthru
        _
      // Predicated region
      $region21: #{tpu_custom_call.1} parent=11 // pred_check
        %p354 = pneg %p160
      $region22: #{tpu_custom_call.1} parent=11 // pred_check_branch
        %356 = sbr.rel (%p354) target = $region24
      $region23: #{tpu_custom_call.1} parent=11 // pred_region
        _
      $region24: #{tpu_custom_call.1} parent=11 // pred_fallthru
        _
      // Predicated region
      $region25: #{tpu_custom_call.1} parent=11 // pred_check
        %p357 = pneg %p181
      $region26: #{tpu_custom_call.1} parent=11 // pred_check_branch
        %359 = sbr.rel (%p357) target = $region28
      $region27: #{tpu_custom_call.1} parent=11 // pred_region
        _
      $region28: #{tpu_custom_call.1} parent=11 // pred_fallthru
        _
      // Predicated region
      $region29: #{tpu_custom_call.1} parent=11 // pred_check
        %p360 = pneg %p202
      $region30: #{tpu_custom_call.1} parent=11 // pred_check_branch
        %362 = sbr.rel (%p360) target = $region32
      $region31: #{tpu_custom_call.1} parent=11 // pred_region
        _
      $region32: #{tpu_custom_call.1} parent=11 // pred_fallthru
        _
      // Predicated region
      $region33: #{tpu_custom_call.1} parent=11 // pred_check
        %p363 = pneg %p223
      $region34: #{tpu_custom_call.1} parent=11 // pred_check_branch
        %365 = sbr.rel (%p363) target = $region36
      $region35: #{tpu_custom_call.1} parent=11 // pred_region
        _
      $region36: #{tpu_custom_call.1} parent=11 // pred_fallthru
        _
      // Predicated region
      $region37: #{tpu_custom_call.1} parent=11 // pred_check
        %p366 = pneg %p244
      $region38: #{tpu_custom_call.1} parent=11 // pred_check_branch
        %368 = sbr.rel (%p366) target = $region40
      $region39: #{tpu_custom_call.1} parent=11 // pred_region
        _
      $region40: #{tpu_custom_call.1} parent=11 // pred_fallthru
        _
      // Predicated region
      $region41: #{tpu_custom_call.1} parent=11 // pred_check
        %p369 = pneg %p265
      $region42: #{tpu_custom_call.1} parent=11 // pred_check_branch
        %371 = sbr.rel (%p369) target = $region44
      $region43: #{tpu_custom_call.1} parent=11 // pred_region
        _
      $region44: #{tpu_custom_call.1} parent=11 // pred_fallthru
        _
      // Predicated region
      $region45: #{tpu_custom_call.1} parent=11 // pred_check
        %p372 = pneg %p286
      $region46: #{tpu_custom_call.1} parent=11 // pred_check_branch
        %374 = sbr.rel (%p372) target = $region48
      $region47: #{tpu_custom_call.1} parent=11 // pred_region
        _
      $region48: #{tpu_custom_call.1} parent=11 // pred_fallthru
        _
      // Predicated region
      $region49: #{tpu_custom_call.1} parent=11 // pred_check
        %p375 = pneg %p307
      $region50: #{tpu_custom_call.1} parent=11 // pred_check_branch
        %377 = sbr.rel (%p375) target = $region52
      $region51: #{tpu_custom_call.1} parent=11 // pred_region
        _
      $region52: #{tpu_custom_call.1} parent=11 // pred_fallthru
        _
    $region12: #{tpu_custom_call.1} parent=5 // pred_fallthru
      _
    %p378 = scmp.lt.s32.totalorder %s19, 2
    // Predicated region
    $region53: #{tpu_custom_call.1} parent=5 // pred_check
      %p379 = pneg %p378
    $region54: #{tpu_custom_call.1} parent=5 // pred_check_branch
      %381 = sbr.rel (%p379) target = $region56
    $region55: #{tpu_custom_call.1} parent=5 // pred_region
      // Predicated region
      $region57: #{tpu_custom_call.1} parent=55 // pred_check
        %p382 = pneg %p39
      $region58: #{tpu_custom_call.1} parent=55 // pred_check_branch
        %384 = sbr.rel (%p382) target = $region60
      $region59: #{tpu_custom_call.1} parent=55 // pred_region
        %s385 = smul.u32 3, %s19
        %p386 = scmp.lt.s32.totalorder %s385, 5
        %s387 = scalar_select %p386, %s385, 5
        %s388 = smul.addr %s387, 8
        %s389 = scalar_lea.vmem %s0, %s388
        %s390 = smul.u32 3, %s19
      $region60: #{tpu_custom_call.1} parent=55 // pred_fallthru
        _
      // Predicated region
      $region61: #{tpu_custom_call.1} parent=55 // pred_check
        %p391 = pneg %p65
      $region62: #{tpu_custom_call.1} parent=55 // pred_check_branch
        %393 = sbr.rel (%p391) target = $region64
      $region63: #{tpu_custom_call.1} parent=55 // pred_region
        %s394 = smul.u32 3, %s19
        %p395 = scmp.lt.s32.totalorder %s394, 5
        %s396 = scalar_select %p395, %s394, 5
        %s397 = smul.addr %s396, 8
        %s398 = scalar_lea.vmem %s1, %s397
        %s399 = smul.u32 3, %s19
      $region64: #{tpu_custom_call.1} parent=55 // pred_fallthru
        _
      // Predicated region
      $region65: #{tpu_custom_call.1} parent=55 // pred_check
        %p400 = pneg %p91
      $region66: #{tpu_custom_call.1} parent=55 // pred_check_branch
        %402 = sbr.rel (%p400) target = $region68
      $region67: #{tpu_custom_call.1} parent=55 // pred_region
        %s403 = smul.u32 3, %s19
        %p404 = scmp.lt.s32.totalorder %s403, 5
        %s405 = scalar_select %p404, %s403, 5
        %s406 = smul.addr %s405, 8
        %s407 = scalar_lea.vmem %s2, %s406
        %s408 = smul.u32 3, %s19
      $region68: #{tpu_custom_call.1} parent=55 // pred_fallthru
        _
    $region56: #{tpu_custom_call.1} parent=5 // pred_fallthru
      _
    %p409 = scmp.le.s32.totalorder 1, %s19
    %p410 = scmp.lt.s32.totalorder %s19, 3
    %p411 = pnand %p409, %p410
    %p412 = pneg %p411
    // Predicated region
    $region69: #{tpu_custom_call.1} parent=5 // pred_check
      _
    $region70: #{tpu_custom_call.1} parent=5 // pred_check_branch
      %414 = sbr.rel (%p411) target = $region72
    $region71: #{tpu_custom_call.1} parent=5 // pred_region
      %s415 = ssub.s32 %s19, 1
      %s416 = smul.u32 3, %s24
      %p417 = scmp.lt.s32.totalorder %s416, 5
      %s418 = scalar_select %p417, %s416, 5
      %s419 = smul.addr %s418, 8
      %s420 = scalar_lea.vmem %s0, %s419
      %p421 = pneg %p45
      %p422 = pneg %p42
      %s423 = smul.u32 3, %s24
      %p424 = scmp.lt.s32.totalorder %s423, 5
      %s425 = scalar_select %p424, %s423, 5
      %s426 = smul.addr %s425, 8
      %s427 = scalar_lea.vmem %s1, %s426
      %p428 = pneg %p71
      %p429 = pneg %p68
      %s430 = smul.u32 3, %s24
      %p431 = scmp.lt.s32.totalorder %s430, 5
      %s432 = scalar_select %p431, %s430, 5
      %s433 = smul.addr %s432, 8
      %s434 = scalar_lea.vmem %s2, %s433
      %p435 = pneg %p97
      %p436 = pneg %p94
      %p437 = pneg %p118
      %p438 = pneg %p115
      %p439 = pneg %p139
      %p440 = pneg %p136
      %p441 = pneg %p160
      %p442 = pneg %p157
      %p443 = pneg %p181
      %p444 = pneg %p178
      %p445 = pneg %p202
      %p446 = pneg %p199
      %p447 = pneg %p223
      %p448 = pneg %p220
      %p449 = pneg %p244
      %p450 = pneg %p241
      %p451 = pneg %p265
      %p452 = pneg %p262
      %p453 = pneg %p286
      %p454 = pneg %p283
      %p455 = pneg %p307
      %p456 = pneg %p304
      %p457 = pneg %p333
      %p458 = pneg %p330
      %s459 = smul.u32 3, %s24
      %p460 = scmp.lt.s32.totalorder %s459, 5
      %s461 = scalar_select %p460, %s459, 5
      %s462 = smul.addr %s461, 8
      %s463 = scalar_lea.vmem %s13, %s462
      %s464 = smul.u32 3, %s24
      %p465 = scmp.lt.s32.totalorder %s464, 5
      %s466 = scalar_select %p465, %s464, 5
      %s467 = smul.addr %s466, 8
      %s468 = scalar_lea.vmem %s0, %s467
      %s469 = smul.u32 3, %s24
      %s470 = smul.u32 3, %s24
      %p471 = scmp.lt.s32.totalorder %s470, 5
      %s472 = scalar_select %p471, %s470, 5
      %s473 = smul.addr %s472, 8
      %s474 = scalar_lea.vmem %s1, %s473
      %s475 = smul.u32 3, %s24
      %s476 = smul.u32 3, %s24
      %p477 = scmp.lt.s32.totalorder %s476, 5
      %s478 = scalar_select %p477, %s476, 5
      %s479 = smul.addr %s478, 8
      %s480 = scalar_lea.vmem %s2, %s479
      %s481 = smul.u32 3, %s24
      %s482 = smul.u32 3, %s24
      %p483 = scmp.lt.s32.totalorder %s482, 5
      %s484 = scalar_select %p483, %s482, 5
      %s485 = smul.addr %s484, 8
      %s486 = scalar_lea.vmem %s13, %s485
      %s487 = smul.u32 3, %s24
      %v488 = vld [vmem:[%s468] sm:$0xff]
      %v489 = vld [vmem:[%s468 + $0x8] sm:$0xff]
      %v490 = vld [vmem:[%s468 + $0x10] sm:$0xff]
      %v491 = vld [vmem:[%s3] sm:$0xf]
      %v492 = vld [vmem:[%s474] sm:$0xff]
      %v493 = vld [vmem:[%s474 + $0x8] sm:$0xff]
      %v494 = vld [vmem:[%s474 + $0x10] sm:$0xff]
      %v495 = vld [vmem:[%s4] sm:$0x1]
      %497 = vset.pattern.permute.xlu0 0
      %498 = vperm.xlu0 %497, %v492
      %v499 = vpop.permute.xlu0 %498
      %502 = vset.pattern.permute.xlu0 0
      %503 = vperm.xlu0 %502, %v493
      %v504 = vpop.permute.xlu0 %503
      %507 = vset.pattern.permute.xlu0 0
      %508 = vperm.xlu0 %507, %v494
      %v509 = vpop.permute.xlu0 %508
      %v512 = vlaneseq
      %v513 = vshrl.u32 %v512, 7
      %v514 = vsub.s32 0, %v513
      %v515 = vrot.slane %v495, %v514
      %v517 = vmul.f32 %v499, %v515
      %v518 = vmul.f32 %v504, %v515
      %v519 = vmul.f32 %v509, %v515
      %vm520 = vcmask 31744
      %v522 = vsel %vm520, %v488, 0
      %v525 = vsel %vm520, %v489, 0
      %v528 = vsel %vm520, %v490, 0
      %vm530 = vcmask 1043456
      %v532 = vsel %vm530, %v491, 0
      %534 = vmatprep.subr.mxu0 0.0
      %535 = vmatpush1.msra.mxu0 0.0
      %536 = vmatprep.subr.mxu0 0.0
      %537 = vmatpush1.msra.mxu0 0.0
      %538 = vmatprep.subr.mxu0 0.0
      %539 = vmatpush1.msra.mxu0 0.0
      %540 = vmatprep.subr.mxu0 0.0
      %541 = vmatpush1.msra.mxu0 0.0
      %542 = vmatprep.subr.mxu0 0.0
      %543 = vmatpush1.msra.mxu0 0.0
      %544 = vmatprep.subr.mxu0 0.0
      %545 = vmatpush1.msra.mxu0 0.0
      %546 = vmatprep.subr.mxu0 0.0
      %547 = vmatpush1.msra.mxu0 0.0
      %548 = vmatprep.subr.mxu0 0.0
      %549 = vmatpush1.msra.mxu0 0.0
      %550 = vmatprep.subr.mxu0 0.0
      %551 = vmatpush1.msra.mxu0 0.0
      %552 = vmatprep.subr.mxu0 0.0
      %553 = vmatpush1.msra.mxu0 0.0
      %554 = vmatprep.subr.mxu0 0.0
      %555 = vmatpush1.msra.mxu0 0.0
      %556 = vmatprep.subr.mxu0 0.0
      %557 = vmatpush1.msra.mxu0 0.0
      %558 = vmatprep.subr.mxu0 0.0
      %559 = vmatpush1.msra.mxu0 0.0
      %560 = vmatprep.subr.mxu0 0.0
      %561 = vmatpush1.msra.mxu0 0.0
      %562 = vmatprep.subr.mxu0 0.0
      %563 = vmatpush1.msra.mxu0 0.0
      %564 = vmatprep.subr.mxu0 0.0
      %565 = vmatpush1.msra.mxu0 %v532
      %566 = vmatprep.subr.mxu0 0.0
      %567 = vmatpush2.msra.mxu0 0.0
      %568 = vmatprep.subr.mxu0 0.0
      %569 = vmatpush2.msra.mxu0 0.0
      %570 = vmatprep.subr.mxu0 0.0
      %571 = vmatpush2.msra.mxu0 0.0
      %572 = vmatprep.subr.mxu0 0.0
      %573 = vmatpush2.msra.mxu0 0.0
      %574 = vmatprep.subr.mxu0 0.0
      %575 = vmatpush2.msra.mxu0 0.0
      %576 = vmatprep.subr.mxu0 0.0
      %577 = vmatpush2.msra.mxu0 0.0
      %578 = vmatprep.subr.mxu0 0.0
      %579 = vmatpush2.msra.mxu0 0.0
      %580 = vmatprep.subr.mxu0 0.0
      %581 = vmatpush2.msra.mxu0 0.0
      %582 = vmatprep.subr.mxu0 0.0
      %583 = vmatpush2.msra.mxu0 0.0
      %584 = vmatprep.subr.mxu0 0.0
      %585 = vmatpush2.msra.mxu0 0.0
      %586 = vmatprep.subr.mxu0 0.0
      %587 = vmatpush2.msra.mxu0 0.0
      %588 = vmatprep.subr.mxu0 0.0
      %589 = vmatpush2.msra.mxu0 0.0
      %590 = vmatprep.subr.mxu0 0.0
      %591 = vmatpush2.msra.mxu0 0.0
      %592 = vmatprep.subr.mxu0 0.0
      %593 = vmatpush2.msra.mxu0 0.0
      %594 = vmatprep.subr.mxu0 0.0
      %595 = vmatpush2.msra.mxu0 0.0
      %596 = vmatprep.subr.mxu0 0.0
      %597 = vmatpush2.msra.mxu0 0.0
      %598 = vmatprep.mubr.f32.mxu0 0.0
      %599 = vmatmul.mubr.f32.gmra.mxu0 %v522
      %v600 = vpop.f32.mrf.mxu0
      %v601 = vadd.f32 %v517, %v600
      %v602 = vpop.f32.mrf.mxu0
      %603 = vmatprep.mubr.f32.mxu0 0.0
      %604 = vmatmul.mubr.f32.gmra.mxu0 %v525
      %v605 = vpop.f32.mrf.mxu0
      %v606 = vadd.f32 %v518, %v605
      %v607 = vpop.f32.mrf.mxu0
      %608 = vmatprep.mubr.f32.mxu0 0.0
      %609 = vmatmul.mubr.f32.gmra.mxu0 %v528
      %v610 = vpop.f32.mrf.mxu0
      %v611 = vadd.f32 %v519, %v610
      %v612 = vpop.f32.mrf.mxu0
      %613 = vdwg.mxu0
      %v614 = vld [vmem:[%s480] sm:$0xff]
      %v615 = vld [vmem:[%s480 + $0x8] sm:$0xff]
      %v616 = vld [vmem:[%s480 + $0x10] sm:$0xff]
      %v617 = vld [vmem:[%s5] sm:$0x1]
      %619 = vset.pattern.permute.xlu0 0
      %620 = vperm.xlu0 %619, %v614
      %v621 = vpop.permute.xlu0 %620
      %624 = vset.pattern.permute.xlu0 0
      %625 = vperm.xlu0 %624, %v615
      %v626 = vpop.permute.xlu0 %625
      %629 = vset.pattern.permute.xlu0 0
      %630 = vperm.xlu0 %629, %v616
      %v631 = vpop.permute.xlu0 %630
      %v634 = vlaneseq
      %v635 = vshrl.u32 %v634, 7
      %v636 = vsub.s32 0, %v635
      %v637 = vrot.slane %v617, %v636
      %v639 = vmul.f32 %v621, %v637
      %v640 = vmul.f32 %v626, %v637
      %v641 = vmul.f32 %v631, %v637
      %v642 = vadd.f32 %v601, %v639
      %v643 = vadd.f32 %v606, %v640
      %v644 = vadd.f32 %v611, %v641
      %v645 = vld [vmem:[%s6] sm:$0x1]
      %v647 = vlaneseq
      %v648 = vshrl.u32 %v647, 7
      %v649 = vsub.s32 0, %v648
      %v650 = vrot.slane %v645, %v649
      %v652 = vadd.f32 %v642, %v650
      %v653 = vadd.f32 %v643, %v650
      %v654 = vadd.f32 %v644, %v650
      %v655 = vtanh.pop %v652
      %v656 = vtanh.pop %v653
      %v657 = vtanh.pop %v654
      %v658 = vld [vmem:[%s7] sm:$0xff]
      %v659 = vld [vmem:[%s7 + $0x8] sm:$0xff]
      %v660 = vld [vmem:[%s7 + $0x10] sm:$0xff]
      %v661 = vld [vmem:[%s7 + $0x18] sm:$0xff]
      %v662 = vld [vmem:[%s8] sm:$0x1]
      %v664 = vlaneseq
      %v665 = vshrl.u32 %v664, 7
      %v666 = vsub.s32 0, %v665
      %v667 = vrot.slane %v662, %v666
      %vm669 = vcmask 261120
      %v671 = vsel %vm669, %v655, 0
      %v674 = vsel %vm669, %v656, 0
      %v677 = vsel %vm669, %v657, 0
      %679 = vmatprep.subr.mxu0 0.0
      %680 = vmatpush1.msra.mxu0 0.0
      %681 = vmatprep.subr.mxu0 0.0
      %682 = vmatpush1.msra.mxu0 0.0
      %683 = vmatprep.subr.mxu0 0.0
      %684 = vmatpush1.msra.mxu0 0.0
      %685 = vmatprep.subr.mxu0 0.0
      %686 = vmatpush1.msra.mxu0 0.0
      %687 = vmatprep.subr.mxu0 0.0
      %688 = vmatpush1.msra.mxu0 0.0
      %689 = vmatprep.subr.mxu0 0.0
      %690 = vmatpush1.msra.mxu0 0.0
      %691 = vmatprep.subr.mxu0 0.0
      %692 = vmatpush1.msra.mxu0 0.0
      %693 = vmatprep.subr.mxu0 0.0
      %694 = vmatpush1.msra.mxu0 0.0
      %695 = vmatprep.subr.mxu0 0.0
      %696 = vmatpush1.msra.mxu0 0.0
      %697 = vmatprep.subr.mxu0 0.0
      %698 = vmatpush1.msra.mxu0 0.0
      %699 = vmatprep.subr.mxu0 0.0
      %700 = vmatpush1.msra.mxu0 0.0
      %701 = vmatprep.subr.mxu0 0.0
      %702 = vmatpush1.msra.mxu0 0.0
      %703 = vmatprep.subr.mxu0 0.0
      %704 = vmatpush1.msra.mxu0 %v661
      %705 = vmatprep.subr.mxu0 0.0
      %706 = vmatpush1.msra.mxu0 %v660
      %707 = vmatprep.subr.mxu0 0.0
      %708 = vmatpush1.msra.mxu0 %v659
      %709 = vmatprep.subr.mxu0 0.0
      %710 = vmatpush1.msra.mxu0 %v658
      %711 = vmatprep.subr.mxu0 0.0
      %712 = vmatpush2.msra.mxu0 0.0
      %713 = vmatprep.subr.mxu0 0.0
      %714 = vmatpush2.msra.mxu0 0.0
      %715 = vmatprep.subr.mxu0 0.0
      %716 = vmatpush2.msra.mxu0 0.0
      %717 = vmatprep.subr.mxu0 0.0
      %718 = vmatpush2.msra.mxu0 0.0
      %719 = vmatprep.subr.mxu0 0.0
      %720 = vmatpush2.msra.mxu0 0.0
      %721 = vmatprep.subr.mxu0 0.0
      %722 = vmatpush2.msra.mxu0 0.0
      %723 = vmatprep.subr.mxu0 0.0
      %724 = vmatpush2.msra.mxu0 0.0
      %725 = vmatprep.subr.mxu0 0.0
      %726 = vmatpush2.msra.mxu0 0.0
      %727 = vmatprep.subr.mxu0 0.0
      %728 = vmatpush2.msra.mxu0 0.0
      %729 = vmatprep.subr.mxu0 0.0
      %730 = vmatpush2.msra.mxu0 0.0
      %731 = vmatprep.subr.mxu0 0.0
      %732 = vmatpush2.msra.mxu0 0.0
      %733 = vmatprep.subr.mxu0 0.0
      %734 = vmatpush2.msra.mxu0 0.0
      %735 = vmatprep.subr.mxu0 0.0
      %736 = vmatpush2.msra.mxu0 0.0
      %737 = vmatprep.subr.mxu0 0.0
      %738 = vmatpush2.msra.mxu0 0.0
      %739 = vmatprep.subr.mxu0 0.0
      %740 = vmatpush2.msra.mxu0 0.0
      %741 = vmatprep.subr.mxu0 0.0
      %742 = vmatpush2.msra.mxu0 0.0
      %743 = vmatprep.mubr.f32.mxu0 0.0
      %744 = vmatmul.mubr.f32.gmra.mxu0 %v671
      %v745 = vpop.f32.mrf.mxu0
      %v746 = vadd.f32 %v667, %v745
      %v747 = vpop.f32.mrf.mxu0
      %748 = vmatprep.mubr.f32.mxu0 0.0
      %749 = vmatmul.mubr.f32.gmra.mxu0 %v674
      %v750 = vpop.f32.mrf.mxu0
      %v751 = vadd.f32 %v667, %v750
      %v752 = vpop.f32.mrf.mxu0
      %753 = vmatprep.mubr.f32.mxu0 0.0
      %754 = vmatmul.mubr.f32.gmra.mxu0 %v677
      %v755 = vpop.f32.mrf.mxu0
      %v756 = vadd.f32 %v667, %v755
      %v757 = vpop.f32.mrf.mxu0
      %758 = vdwg.mxu0
      %v759 = vtanh.pop %v746
      %v760 = vtanh.pop %v751
      %v761 = vtanh.pop %v756
      %v762 = vld [vmem:[%s9] sm:$0xff]
      %v763 = vld [vmem:[%s9 + $0x8] sm:$0xff]
      %v764 = vld [vmem:[%s9 + $0x10] sm:$0xff]
      %v765 = vld [vmem:[%s9 + $0x18] sm:$0xff]
      %v766 = vld [vmem:[%s10] sm:$0x1]
      %v768 = vlaneseq
      %v769 = vshrl.u32 %v768, 7
      %v770 = vsub.s32 0, %v769
      %v771 = vrot.slane %v766, %v770
      %v774 = vsel %vm669, %v759, 0
      %v777 = vsel %vm669, %v760, 0
      %v780 = vsel %vm669, %v761, 0
      %782 = vmatprep.subr.mxu0 0.0
      %783 = vmatpush1.msra.mxu0 0.0
      %784 = vmatprep.subr.mxu0 0.0
      %785 = vmatpush1.msra.mxu0 0.0
      %786 = vmatprep.subr.mxu0 0.0
      %787 = vmatpush1.msra.mxu0 0.0
      %788 = vmatprep.subr.mxu0 0.0
      %789 = vmatpush1.msra.mxu0 0.0
      %790 = vmatprep.subr.mxu0 0.0
      %791 = vmatpush1.msra.mxu0 0.0
      %792 = vmatprep.subr.mxu0 0.0
      %793 = vmatpush1.msra.mxu0 0.0
      %794 = vmatprep.subr.mxu0 0.0
      %795 = vmatpush1.msra.mxu0 0.0
      %796 = vmatprep.subr.mxu0 0.0
      %797 = vmatpush1.msra.mxu0 0.0
      %798 = vmatprep.subr.mxu0 0.0
      %799 = vmatpush1.msra.mxu0 0.0
      %800 = vmatprep.subr.mxu0 0.0
      %801 = vmatpush1.msra.mxu0 0.0
      %802 = vmatprep.subr.mxu0 0.0
      %803 = vmatpush1.msra.mxu0 0.0
      %804 = vmatprep.subr.mxu0 0.0
      %805 = vmatpush1.msra.mxu0 0.0
      %806 = vmatprep.subr.mxu0 0.0
      %807 = vmatpush1.msra.mxu0 %v765
      %808 = vmatprep.subr.mxu0 0.0
      %809 = vmatpush1.msra.mxu0 %v764
      %810 = vmatprep.subr.mxu0 0.0
      %811 = vmatpush1.msra.mxu0 %v763
      %812 = vmatprep.subr.mxu0 0.0
      %813 = vmatpush1.msra.mxu0 %v762
      %814 = vmatprep.subr.mxu0 0.0
      %815 = vmatpush2.msra.mxu0 0.0
      %816 = vmatprep.subr.mxu0 0.0
      %817 = vmatpush2.msra.mxu0 0.0
      %818 = vmatprep.subr.mxu0 0.0
      %819 = vmatpush2.msra.mxu0 0.0
      %820 = vmatprep.subr.mxu0 0.0
      %821 = vmatpush2.msra.mxu0 0.0
      %822 = vmatprep.subr.mxu0 0.0
      %823 = vmatpush2.msra.mxu0 0.0
      %824 = vmatprep.subr.mxu0 0.0
      %825 = vmatpush2.msra.mxu0 0.0
      %826 = vmatprep.subr.mxu0 0.0
      %827 = vmatpush2.msra.mxu0 0.0
      %828 = vmatprep.subr.mxu0 0.0
      %829 = vmatpush2.msra.mxu0 0.0
      %830 = vmatprep.subr.mxu0 0.0
      %831 = vmatpush2.msra.mxu0 0.0
      %832 = vmatprep.subr.mxu0 0.0
      %833 = vmatpush2.msra.mxu0 0.0
      %834 = vmatprep.subr.mxu0 0.0
      %835 = vmatpush2.msra.mxu0 0.0
      %836 = vmatprep.subr.mxu0 0.0
      %837 = vmatpush2.msra.mxu0 0.0
      %838 = vmatprep.subr.mxu0 0.0
      %839 = vmatpush2.msra.mxu0 0.0
      %840 = vmatprep.subr.mxu0 0.0
      %841 = vmatpush2.msra.mxu0 0.0
      %842 = vmatprep.subr.mxu0 0.0
      %843 = vmatpush2.msra.mxu0 0.0
      %844 = vmatprep.subr.mxu0 0.0
      %845 = vmatpush2.msra.mxu0 0.0
      %846 = vmatprep.mubr.f32.mxu0 0.0
      %847 = vmatmul.mubr.f32.gmra.mxu0 %v774
      %v848 = vpop.f32.mrf.mxu0
      %v849 = vadd.f32 %v771, %v848
      %v850 = vpop.f32.mrf.mxu0
      %851 = vmatprep.mubr.f32.mxu0 0.0
      %852 = vmatmul.mubr.f32.gmra.mxu0 %v777
      %v853 = vpop.f32.mrf.mxu0
      %v854 = vadd.f32 %v771, %v853
      %v855 = vpop.f32.mrf.mxu0
      %856 = vmatprep.mubr.f32.mxu0 0.0
      %857 = vmatmul.mubr.f32.gmra.mxu0 %v780
      %v858 = vpop.f32.mrf.mxu0
      %v859 = vadd.f32 %v771, %v858
      %v860 = vpop.f32.mrf.mxu0
      %861 = vdwg.mxu0
      %v862 = vtanh.pop %v849
      %v863 = vtanh.pop %v854
      %v864 = vtanh.pop %v859
      %v865 = vld [vmem:[%s11] sm:$0xff]
      %v866 = vld [vmem:[%s11 + $0x8] sm:$0xff]
      %v867 = vld [vmem:[%s11 + $0x10] sm:$0xff]
      %v868 = vld [vmem:[%s11 + $0x18] sm:$0xff]
      %v869 = vld [vmem:[%s12] sm:$0x1]
      %v871 = vlaneseq
      %v872 = vshrl.u32 %v871, 7
      %v873 = vsub.s32 0, %v872
      %v874 = vrot.slane %v869, %v873
      %v877 = vsel %vm669, %v862, 0
      %v880 = vsel %vm669, %v863, 0
      %v883 = vsel %vm669, %v864, 0
      %885 = vmatprep.subr.mxu0 0.0
      %886 = vmatpush1.msra.mxu0 0.0
      %887 = vmatprep.subr.mxu0 0.0
      %888 = vmatpush1.msra.mxu0 0.0
      %889 = vmatprep.subr.mxu0 0.0
      %890 = vmatpush1.msra.mxu0 0.0
      %891 = vmatprep.subr.mxu0 0.0
      %892 = vmatpush1.msra.mxu0 0.0
      %893 = vmatprep.subr.mxu0 0.0
      %894 = vmatpush1.msra.mxu0 0.0
      %895 = vmatprep.subr.mxu0 0.0
      %896 = vmatpush1.msra.mxu0 0.0
      %897 = vmatprep.subr.mxu0 0.0
      %898 = vmatpush1.msra.mxu0 0.0
      %899 = vmatprep.subr.mxu0 0.0
      %900 = vmatpush1.msra.mxu0 0.0
      %901 = vmatprep.subr.mxu0 0.0
      %902 = vmatpush1.msra.mxu0 0.0
      %903 = vmatprep.subr.mxu0 0.0
      %904 = vmatpush1.msra.mxu0 0.0
      %905 = vmatprep.subr.mxu0 0.0
      %906 = vmatpush1.msra.mxu0 0.0
      %907 = vmatprep.subr.mxu0 0.0
      %908 = vmatpush1.msra.mxu0 0.0
      %909 = vmatprep.subr.mxu0 0.0
      %910 = vmatpush1.msra.mxu0 %v868
      %911 = vmatprep.subr.mxu0 0.0
      %912 = vmatpush1.msra.mxu0 %v867
      %913 = vmatprep.subr.mxu0 0.0
      %914 = vmatpush1.msra.mxu0 %v866
      %915 = vmatprep.subr.mxu0 0.0
      %916 = vmatpush1.msra.mxu0 %v865
      %917 = vmatprep.subr.mxu0 0.0
      %918 = vmatpush2.msra.mxu0 0.0
      %919 = vmatprep.subr.mxu0 0.0
      %920 = vmatpush2.msra.mxu0 0.0
      %921 = vmatprep.subr.mxu0 0.0
      %922 = vmatpush2.msra.mxu0 0.0
      %923 = vmatprep.subr.mxu0 0.0
      %924 = vmatpush2.msra.mxu0 0.0
      %925 = vmatprep.subr.mxu0 0.0
      %926 = vmatpush2.msra.mxu0 0.0
      %927 = vmatprep.subr.mxu0 0.0
      %928 = vmatpush2.msra.mxu0 0.0
      %929 = vmatprep.subr.mxu0 0.0
      %930 = vmatpush2.msra.mxu0 0.0
      %931 = vmatprep.subr.mxu0 0.0
      %932 = vmatpush2.msra.mxu0 0.0
      %933 = vmatprep.subr.mxu0 0.0
      %934 = vmatpush2.msra.mxu0 0.0
      %935 = vmatprep.subr.mxu0 0.0
      %936 = vmatpush2.msra.mxu0 0.0
      %937 = vmatprep.subr.mxu0 0.0
      %938 = vmatpush2.msra.mxu0 0.0
      %939 = vmatprep.subr.mxu0 0.0
      %940 = vmatpush2.msra.mxu0 0.0
      %941 = vmatprep.subr.mxu0 0.0
      %942 = vmatpush2.msra.mxu0 0.0
      %943 = vmatprep.subr.mxu0 0.0
      %944 = vmatpush2.msra.mxu0 0.0
      %945 = vmatprep.subr.mxu0 0.0
      %946 = vmatpush2.msra.mxu0 0.0
      %947 = vmatprep.subr.mxu0 0.0
      %948 = vmatpush2.msra.mxu0 0.0
      %949 = vmatprep.mubr.f32.mxu0 0.0
      %950 = vmatmul.mubr.f32.gmra.mxu0 %v877
      %v951 = vpop.f32.mrf.mxu0
      %v952 = vadd.f32 %v874, %v951
      %v953 = vpop.f32.mrf.mxu0
      %954 = vmatprep.mubr.f32.mxu0 0.0
      %955 = vmatmul.mubr.f32.gmra.mxu0 %v880
      %v956 = vpop.f32.mrf.mxu0
      %v957 = vadd.f32 %v874, %v956
      %v958 = vpop.f32.mrf.mxu0
      %959 = vmatprep.mubr.f32.mxu0 0.0
      %960 = vmatmul.mubr.f32.gmra.mxu0 %v883
      %v961 = vpop.f32.mrf.mxu0
      %v962 = vadd.f32 %v874, %v961
      %v963 = vpop.f32.mrf.mxu0
      %964 = vdwg.mxu0
      %965 = vst.msk [vmem:[%s486] sm:$0xff] %vm520, %v952
      %966 = vst.msk [vmem:[%s486 + $0x8] sm:$0xff] %vm520, %v957
      %967 = vst.msk [vmem:[%s486 + $0x10] sm:$0xff] %vm520, %v962
      %s968 = smul.u32 3, %s24
      %p969 = scmp.lt.s32.totalorder %s968, 5
      %s970 = scalar_select %p969, %s968, 5
      %s971 = smul.addr %s970, 8
      %s972 = scalar_lea.vmem %s13, %s971
      // Predicated region
      $region73: #{tpu_custom_call.1} parent=71 // pred_check
        %p973 = pneg %p330
      $region74: #{tpu_custom_call.1} parent=71 // pred_check_branch
        %975 = sbr.rel (%p973) target = $region76
      $region75: #{tpu_custom_call.1} parent=71 // pred_region
        %s976 = smul.u32 3, %s24
      $region76: #{tpu_custom_call.1} parent=71 // pred_fallthru
        _
    $region72: #{tpu_custom_call.1} parent=5 // pred_fallthru
      _
    %p977 = scmp.le.s32.totalorder 2, %s19
    // Predicated region
    $region77: #{tpu_custom_call.1} parent=5 // pred_check
      %p978 = pneg %p977
    $region78: #{tpu_custom_call.1} parent=5 // pred_check_branch
      %980 = sbr.rel (%p978) target = $region80
    $region79: #{tpu_custom_call.1} parent=5 // pred_region
      %s981 = ssub.s32 %s19, 2
      // Predicated region
      $region81: #{tpu_custom_call.1} parent=79 // pred_check
        %p982 = pneg %p336
      $region82: #{tpu_custom_call.1} parent=79 // pred_check_branch
        %984 = sbr.rel (%p982) target = $region84
      $region83: #{tpu_custom_call.1} parent=79 // pred_region
        %s985 = smul.u32 3, %s25
        %p986 = scmp.lt.s32.totalorder %s985, 5
        %s987 = scalar_select %p986, %s985, 5
        %s988 = smul.addr %s987, 8
        %s989 = scalar_lea.vmem %s13, %s988
      $region84: #{tpu_custom_call.1} parent=79 // pred_fallthru
        _
    $region80: #{tpu_custom_call.1} parent=5 // pred_fallthru
      _
  $region6: #{tpu_custom_call.1} parent=0 // loop_footer
    %s23 = sadd.s32 1, %s19
  $region7: #{tpu_custom_call.1} parent=0 // loop_footer_branch
    %18 = sbr.rel target = $region3
  $region8: #{tpu_custom_call.1} parent=0 // loop_exit
    _

</llo_original>
